<compile_context>
chip_gen: v7x
topology: tpu7x:2x2x1
jax: 0.10.0
libtpu: 0.0.40
codegen_flags: <defaults>
</compile_context>

<pallas_src>
import functools

import jax
import jax.numpy as jnp
from jax.experimental import pallas as pl
from jax.experimental.pallas import tpu as pltpu

LANE = 128
SUBLANE = 8
MAX_BLOCK_ROWS = 1024  # (1024, 128) f32 tile = 512 KiB per input per buffer


def _round_up(x, m):
    return ((x + m - 1) // m) * m


def _layout(n_elems):
    """Pick (total_rows, block_rows, slices) for a flattened (rows, 128) view."""
    rows = _round_up(pl.cdiv(n_elems, LANE), SUBLANE)
    if rows <= MAX_BLOCK_ROWS:
        # Single block covers everything; no need for a parallel slice axis.
        return rows, rows, 1
    slices = 2  # let v7x's two TensorCores split the stream; no-op on 1-TC chips
    br = MAX_BLOCK_ROWS
    # Shrink the block if padding to (slices * br) granularity would waste >~25%.
    while br > SUBLANE and (_round_up(rows, slices * br) - rows) > max(rows // 4, SUBLANE):
        br //= 2
    return _round_up(rows, slices * br), br, slices


def _padded_view(x, total_rows):
    """Row-major flatten to (total_rows, 128), zero-padding only the tail."""
    flat = x.reshape(-1)
    pad = total_rows * LANE - flat.shape[0]
    if pad:
        flat = jnp.pad(flat, (0, pad))
    return flat.reshape(total_rows, LANE)


def _fused_loss_kernel(zh_ref, z_ref, nh_ref, n_ref, out_ref):
    """Accumulate sum|dz| and sum(dn^2) into (8,128) vector accumulators.

    out_ref block: (1, 2, 8, 128); index 0 -> |z0_hat - z0| sums,
                                   index 1 -> (noise_hat - noise)^2 sums.
    The output block stays resident across the inner ("arbitrary") grid axis.
    """
    i = pl.program_id(1)

    @pl.when(i == 0)
    def _():
        out_ref[...] = jnp.zeros_like(out_ref)

    dz = zh_ref[...].astype(jnp.float32) - z_ref[...].astype(jnp.float32)
    dn = nh_ref[...].astype(jnp.float32) - n_ref[...].astype(jnp.float32)
    br = dz.shape[0]

    # Fold (br, 128) -> (8, 128) with plain VPU adds (no cross-lane reduce).
    out_ref[0, 0] += jnp.abs(dz).reshape(br // SUBLANE, SUBLANE, LANE).sum(axis=0)
    out_ref[0, 1] += (dn * dn).reshape(br // SUBLANE, SUBLANE, LANE).sum(axis=0)


def _pair_sum_kernel(a_ref, b_ref, out_ref, *, square):
    """Accumulate sum|a-b| (square=False) or sum((a-b)^2) (square=True)."""
    i = pl.program_id(1)

    @pl.when(i == 0)
    def _():
        out_ref[...] = jnp.zeros_like(out_ref)

    d = a_ref[...].astype(jnp.float32) - b_ref[...].astype(jnp.float32)
    v = d * d if square else jnp.abs(d)
    br = v.shape[0]
    out_ref[0] += v.reshape(br // SUBLANE, SUBLANE, LANE).sum(axis=0)


def _pair_sum(a, b, *, square):
    """Global sum of |a-b| or (a-b)^2 via a single-pair reduction kernel."""
    n = int(a.size)
    total_rows, br, slices = _layout(n)
    steps = total_rows // (slices * br)

    a2 = _padded_view(a, total_rows)
    b2 = _padded_view(b, total_rows)

    tile = pl.BlockSpec((br, LANE), lambda s, i: (s * steps + i, 0))
    out = pl.pallas_call(
        functools.partial(_pair_sum_kernel, square=square),
        out_shape=jax.ShapeDtypeStruct((slices, SUBLANE, LANE), jnp.float32),
        grid=(slices, steps),
        in_specs=[tile, tile],
        out_specs=pl.BlockSpec((1, SUBLANE, LANE), lambda s, i: (s, 0, 0)),
        compiler_params=pltpu.CompilerParams(
            dimension_semantics=("parallel", "arbitrary"),
        ),
    )(a2, b2)
    return jnp.sum(out)


def combined_latent_noise_loss(noise_hat, noise, z0_hat, z0,
                               l1_weight=1.0, l2_weight=1.0):
    assert noise_hat.shape == noise.shape
    assert z0_hat.shape == z0.shape

    n_noise = int(noise.size)
    n_latent = int(z0.size)

    if n_latent == n_noise:
        # Fused path: one streaming pass over all four tensors.
        total_rows, br, slices = _layout(n_latent)
        steps = total_rows // (slices * br)

        views = [_padded_view(t, total_rows) for t in (z0_hat, z0, noise_hat, noise)]

        tile = pl.BlockSpec((br, LANE), lambda s, i: (s * steps + i, 0))
        out = pl.pallas_call(
            _fused_loss_kernel,
            out_shape=jax.ShapeDtypeStruct((slices, 2, SUBLANE, LANE), jnp.float32),
            grid=(slices, steps),
            in_specs=[tile, tile, tile, tile],
            out_specs=pl.BlockSpec((1, 2, SUBLANE, LANE), lambda s, i: (s, 0, 0, 0)),
            compiler_params=pltpu.CompilerParams(
                dimension_semantics=("parallel", "arbitrary"),
            ),
        )(*views)

        l1_sum = jnp.sum(out[:, 0])
        l2_sum = jnp.sum(out[:, 1])
    else:
        # Different element counts: reduce each pair over its own grid so the
        # smaller pair is not padded/streamed up to the larger one's size.
        l1_sum = _pair_sum(z0_hat, z0, square=False)
        l2_sum = _pair_sum(noise_hat, noise, square=True)

    l1_mean = l1_sum / jnp.float32(n_latent)
    l2_mean = l2_sum / jnp.float32(n_noise)
    return jnp.float32(l1_weight) * l1_mean + jnp.float32(l2_weight) * l2_mean


if __name__ == "__main__":
    key = jax.random.PRNGKey(0)
    k1, k2, k3, k4 = jax.random.split(key, 4)

    # Small shapes consistent with diffusion latents / noise (NCHW).
    shape = (2, 4, 16, 16)
    noise_hat = jax.random.normal(k1, shape, dtype=jnp.float32)
    noise = jax.random.normal(k2, shape, dtype=jnp.float32)
    z0_hat = jax.random.normal(k3, shape, dtype=jnp.float32)
    z0 = jax.random.normal(k4, shape, dtype=jnp.float32)

    loss = combined_latent_noise_loss(noise_hat, noise, z0_hat, z0,
                                      l1_weight=1.0, l2_weight=1.0)
    loss = jax.block_until_ready(loss)

    # Reference check (plain JAX).
    ref = jnp.mean(jnp.abs(z0_hat - z0)) + jnp.mean((noise_hat - noise) ** 2)
    assert jnp.allclose(loss, ref, rtol=1e-5, atol=1e-5), (loss, ref)

    print("KERNEL_OK")
</pallas_src>

<mosaic_0001>
module attributes {stable_mosaic.version = 11 : i64} {
  func.func @_fused_loss_kernel(%arg0: i32, %arg1: i32, %arg2: memref<16x128xf32, #tpu.memory_space<vmem>>, %arg3: memref<16x128xf32, #tpu.memory_space<vmem>>, %arg4: memref<16x128xf32, #tpu.memory_space<vmem>>, %arg5: memref<16x128xf32, #tpu.memory_space<vmem>>, %arg6: memref<1x2x8x128xf32, #tpu.memory_space<vmem>>) attributes {dimension_semantics = [#tpu.dimension_semantics<parallel>, #tpu.dimension_semantics<arbitrary>], iteration_bounds = array<i64: 1, 1>, scalar_prefetch = 0 : i64, scratch_operands = 0 : i64, tpu.core_type = #tpu.core_type<tc>, window_params = [{transform_indices = @transform_0, window_bounds = array<i64: 16, 128>}, {transform_indices = @transform_1, window_bounds = array<i64: 16, 128>}, {transform_indices = @transform_2, window_bounds = array<i64: 16, 128>}, {transform_indices = @transform_3, window_bounds = array<i64: 16, 128>}, {transform_indices = @transform_4, window_bounds = array<i64: 1, 2, 8, 128>}]} {
    %c0_i32 = arith.constant 0 : i32
    %0 = arith.cmpi eq, %arg1, %c0_i32 : i32
    %1 = arith.extui %0 : i1 to i32
    %c0_i32_0 = arith.constant 0 : i32
    %2 = arith.cmpi ne, %1, %c0_i32_0 : i32
    scf.if %2 {
      %cst_24 = arith.constant 0.000000e+00 : f32
      %27 = vector.broadcast %cst_24 : f32 to vector<1x2x8x128xf32>
      %c0_25 = arith.constant 0 : index
      %c0_26 = arith.constant 0 : index
      %c0_27 = arith.constant 0 : index
      %c0_28 = arith.constant 0 : index
      %28 = vector.load %arg6[%c0_25, %c0_26, %c0_27, %c0_28] : memref<1x2x8x128xf32, #tpu.memory_space<vmem>>, vector<1x2x8x128xf32>
      tpu.vector_store %arg6[%c0_25, %c0_26, %c0_27, %c0_28], %27 {strides = array<i32>} : memref<1x2x8x128xf32, #tpu.memory_space<vmem>>, vector<1x2x8x128xf32>,
    } else {
    }
    %c0 = arith.constant 0 : index
    %c0_1 = arith.constant 0 : index
    %3 = vector.load %arg2[%c0, %c0_1] : memref<16x128xf32, #tpu.memory_space<vmem>>, vector<16x128xf32>
    %c0_2 = arith.constant 0 : index
    %c0_3 = arith.constant 0 : index
    %4 = vector.load %arg3[%c0_2, %c0_3] : memref<16x128xf32, #tpu.memory_space<vmem>>, vector<16x128xf32>
    %5 = arith.subf %3, %4 : vector<16x128xf32>
    %c0_4 = arith.constant 0 : index
    %c0_5 = arith.constant 0 : index
    %6 = vector.load %arg4[%c0_4, %c0_5] : memref<16x128xf32, #tpu.memory_space<vmem>>, vector<16x128xf32>
    %c0_6 = arith.constant 0 : index
    %c0_7 = arith.constant 0 : index
    %7 = vector.load %arg5[%c0_6, %c0_7] : memref<16x128xf32, #tpu.memory_space<vmem>>, vector<16x128xf32>
    %8 = arith.subf %6, %7 : vector<16x128xf32>
    %c0_8 = arith.constant 0 : index
    %c0_9 = arith.constant 0 : index
    %c0_10 = arith.constant 0 : index
    %c0_11 = arith.constant 0 : index
    %9 = vector.load %arg6[%c0_8, %c0_9, %c0_10, %c0_11] : memref<1x2x8x128xf32, #tpu.memory_space<vmem>>, vector<1x1x8x128xf32>
    %10 = vector.shape_cast %9 : vector<1x1x8x128xf32> to vector<8x128xf32>
    %11 = math.absf %5 : vector<16x128xf32>
    %12 = vector.shape_cast %11 : vector<16x128xf32> to vector<2x8x128xf32>
    %cst = arith.constant dense<0.000000e+00> : vector<8x128xf32>
    %13 = vector.multi_reduction <add>, %12, %cst [0] : vector<2x8x128xf32> to vector<8x128xf32>
    %14 = arith.addf %10, %13 : vector<8x128xf32>
    %c0_12 = arith.constant 0 : index
    %c0_13 = arith.constant 0 : index
    %c0_14 = arith.constant 0 : index
    %c0_15 = arith.constant 0 : index
    %15 = vector.load %arg6[%c0_12, %c0_13, %c0_14, %c0_15] : memref<1x2x8x128xf32, #tpu.memory_space<vmem>>, vector<1x1x8x128xf32>
    %16 = vector.shape_cast %15 : vector<1x1x8x128xf32> to vector<8x128xf32>
    %17 = vector.shape_cast %14 : vector<8x128xf32> to vector<1x1x8x128xf32>
    tpu.vector_store %arg6[%c0_12, %c0_13, %c0_14, %c0_15], %17 {strides = array<i32>} : memref<1x2x8x128xf32, #tpu.memory_space<vmem>>, vector<1x1x8x128xf32>,
    %c0_16 = arith.constant 0 : index
    %c1 = arith.constant 1 : index
    %c0_17 = arith.constant 0 : index
    %c0_18 = arith.constant 0 : index
    %18 = vector.load %arg6[%c0_16, %c1, %c0_17, %c0_18] : memref<1x2x8x128xf32, #tpu.memory_space<vmem>>, vector<1x1x8x128xf32>
    %19 = vector.shape_cast %18 : vector<1x1x8x128xf32> to vector<8x128xf32>
    %20 = arith.mulf %8, %8 : vector<16x128xf32>
    %21 = vector.shape_cast %20 : vector<16x128xf32> to vector<2x8x128xf32>
    %cst_19 = arith.constant dense<0.000000e+00> : vector<8x128xf32>
    %22 = vector.multi_reduction <add>, %21, %cst_19 [0] : vector<2x8x128xf32> to vector<8x128xf32>
    %23 = arith.addf %19, %22 : vector<8x128xf32>
    %c0_20 = arith.constant 0 : index
    %c1_21 = arith.constant 1 : index
    %c0_22 = arith.constant 0 : index
    %c0_23 = arith.constant 0 : index
    %24 = vector.load %arg6[%c0_20, %c1_21, %c0_22, %c0_23] : memref<1x2x8x128xf32, #tpu.memory_space<vmem>>, vector<1x1x8x128xf32>
    %25 = vector.shape_cast %24 : vector<1x1x8x128xf32> to vector<8x128xf32>
    %26 = vector.shape_cast %23 : vector<8x128xf32> to vector<1x1x8x128xf32>
    tpu.vector_store %arg6[%c0_20, %c1_21, %c0_22, %c0_23], %26 {strides = array<i32>} : memref<1x2x8x128xf32, #tpu.memory_space<vmem>>, vector<1x1x8x128xf32>,
    return
  }
  func.func @transform_0(%arg0: i32, %arg1: i32) -> (i32, i32) {
    %c1_i32 = arith.constant 1 : i32
    %0 = arith.muli %arg0, %c1_i32 : i32
    %1 = arith.addi %0, %arg1 : i32
    %c0_i32 = arith.constant 0 : i32
    %c0_i32_0 = arith.constant 0 : i32
    return %1, %c0_i32 : i32, i32
  }
  func.func @transform_1(%arg0: i32, %arg1: i32) -> (i32, i32) {
    %c1_i32 = arith.constant 1 : i32
    %0 = arith.muli %arg0, %c1_i32 : i32
    %1 = arith.addi %0, %arg1 : i32
    %c0_i32 = arith.constant 0 : i32
    %c0_i32_0 = arith.constant 0 : i32
    return %1, %c0_i32 : i32, i32
  }
  func.func @transform_2(%arg0: i32, %arg1: i32) -> (i32, i32) {
    %c1_i32 = arith.constant 1 : i32
    %0 = arith.muli %arg0, %c1_i32 : i32
    %1 = arith.addi %0, %arg1 : i32
    %c0_i32 = arith.constant 0 : i32
    %c0_i32_0 = arith.constant 0 : i32
    return %1, %c0_i32 : i32, i32
  }
  func.func @transform_3(%arg0: i32, %arg1: i32) -> (i32, i32) {
    %c1_i32 = arith.constant 1 : i32
    %0 = arith.muli %arg0, %c1_i32 : i32
    %1 = arith.addi %0, %arg1 : i32
    %c0_i32 = arith.constant 0 : i32
    %c0_i32_0 = arith.constant 0 : i32
    return %1, %c0_i32 : i32, i32
  }
  func.func @transform_4(%arg0: i32, %arg1: i32) -> (i32, i32, i32, i32) {
    %c0_i32 = arith.constant 0 : i32
    %c0_i32_0 = arith.constant 0 : i32
    %c0_i32_1 = arith.constant 0 : i32
    %c0_i32_2 = arith.constant 0 : i32
    return %arg0, %c0_i32, %c0_i32_0, %c0_i32_1 : i32, i32, i32, i32
  }
}

</mosaic_0001>

<llo_original>
// kernel: tpu_custom_call.1
$region0: #{tpu_custom_call.1}
  #allocation0 [shape = 'u32[]', space=smem, size = 0x4, offset = 0x4, fixed_abs, tag = 'smem constant byte address 0x4 - core index']
  #allocation1 [shape = 'u32[144,128]{1,0:T(1,128)}', space=vmem, size = 0x12000, scoped, tag = 'internal scratch']
  %s0 = inlined_call_operand.hbm [shape: f32[16,128], index: 0, kind: input, shape index: {}]
  %s1 = inlined_call_operand.hbm [shape: f32[16,128], index: 1, kind: input, shape index: {}]
  %s2 = inlined_call_operand.hbm [shape: f32[16,128], index: 2, kind: input, shape index: {}]
  %s3 = inlined_call_operand.hbm [shape: f32[16,128], index: 3, kind: input, shape index: {}]
  %s4 = inlined_call_operand.hbm [shape: f32[1,2,8,128], index: 4, kind: output, shape index: {}]
  %s5 = sld [smem:[#allocation0]]
  $region46: #{tpu_custom_call.1} parent=0
    _
  %s7 = ssub.s32 1, %s5
  %s8 = scalar_select 0, %s7, %s5
  $region1: #{tpu_custom_call.1} parent=0
    #allocation2 [shape = 'u8[8192]{0}', space=vmem, size = 0x2000, scoped, tag = 'input window, operand 0, single buffered']
    #allocation3 [shape = 's32[1]{0}', space=sflag, size = 0x4, scoped, tag = 'scoped memory for tpu_custom_call.1']
    #allocation4 [shape = 's32[1]{0}', space=sflag, size = 0x4, scoped, tag = 'scoped memory for tpu_custom_call.1']
    #allocation5 [shape = 'u8[8192]{0}', space=vmem, size = 0x2000, scoped, tag = 'input window, operand 1, single buffered']
    #allocation6 [shape = 's32[1]{0}', space=sflag, size = 0x4, scoped, tag = 'scoped memory for tpu_custom_call.1']
    #allocation7 [shape = 'u8[8192]{0}', space=vmem, size = 0x2000, scoped, tag = 'input window, operand 2, single buffered']
    #allocation8 [shape = 'u8[8192]{0}', space=vmem, size = 0x2000, scoped, tag = 'input window, operand 3, single buffered']
    #allocation9 [shape = 's32[1]{0}', space=sflag, size = 0x4, scoped, tag = 'scoped memory for tpu_custom_call.1']
    #allocation10 [shape = 'u8[8192]{0}', space=vmem, size = 0x2000, scoped, tag = 'output window, operand 0, single buffered']
    %9 = vsyncpa [#allocation3], 0
    %10 = vsyncpa [#allocation6], 0
    %11 = vsyncpa [#allocation9], 0
    %12 = vsyncpa [#allocation4], 0
    // Predicated region
    $region2: #{tpu_custom_call.1} parent=1 // pred_check
      _
    $region3: #{tpu_custom_call.1} parent=1 // pred_check_branch
      %14 = sbr.rel (0) target = $region5
    $region4: #{tpu_custom_call.1} parent=1 // pred_region
      %s15 = sadd.s32 0, 0
      %s16 = smul.u32 2, %s15
      %s18 = ssub.s32 256, 256
      %19 = vsyncadd [#allocation3], %s18
      %s20 = smul.addr %s16, 128
      %s21 = scalar_lea.hbm %s0, %s20
      %s22 = sshll.u32 [#allocation2], 4
      %s23 = int_to_ptr.vmem [resolvable:$true] %s22
      %28 = dma.hbm_to_vmem [thread:$0]  %s21, 256, %s23, [#allocation3], 128, 128, 8
    $region5: #{tpu_custom_call.1} parent=1 // pred_fallthru
      _
    // Predicated region
    $region6: #{tpu_custom_call.1} parent=1 // pred_check
      _
    $region7: #{tpu_custom_call.1} parent=1 // pred_check_branch
      %30 = sbr.rel (0) target = $region9
    $region8: #{tpu_custom_call.1} parent=1 // pred_region
      %s31 = sadd.s32 0, 0
      %s32 = smul.u32 2, %s31
      %s34 = ssub.s32 256, 256
      %35 = vsyncadd [#allocation6], %s34
      %s36 = smul.addr %s32, 128
      %s37 = scalar_lea.hbm %s1, %s36
      %s38 = sshll.u32 [#allocation5], 4
      %s39 = int_to_ptr.vmem [resolvable:$true] %s38
      %44 = dma.hbm_to_vmem [thread:$0]  %s37, 256, %s39, [#allocation6], 128, 128, 8
    $region9: #{tpu_custom_call.1} parent=1 // pred_fallthru
      _
    // Predicated region
    $region10: #{tpu_custom_call.1} parent=1 // pred_check
      _
    $region11: #{tpu_custom_call.1} parent=1 // pred_check_branch
      %46 = sbr.rel (0) target = $region13
    $region12: #{tpu_custom_call.1} parent=1 // pred_region
      %s47 = sadd.s32 0, 0
      %s48 = smul.u32 2, %s47
      %s50 = ssub.s32 256, 256
      %51 = vsyncadd [#allocation6], %s50
      %s52 = smul.addr %s48, 128
      %s53 = scalar_lea.hbm %s2, %s52
      %s54 = sshll.u32 [#allocation7], 4
      %s55 = int_to_ptr.vmem [resolvable:$true] %s54
      %60 = dma.hbm_to_vmem [thread:$0]  %s53, 256, %s55, [#allocation6], 128, 128, 8
    $region13: #{tpu_custom_call.1} parent=1 // pred_fallthru
      _
    // Predicated region
    $region14: #{tpu_custom_call.1} parent=1 // pred_check
      _
    $region15: #{tpu_custom_call.1} parent=1 // pred_check_branch
      %62 = sbr.rel (0) target = $region17
    $region16: #{tpu_custom_call.1} parent=1 // pred_region
      %s63 = sadd.s32 0, 0
      %s64 = smul.u32 2, %s63
      %s66 = ssub.s32 256, 256
      %67 = vsyncadd [#allocation9], %s66
      %s68 = smul.addr %s64, 128
      %s69 = scalar_lea.hbm %s3, %s68
      %s70 = sshll.u32 [#allocation8], 4
      %s71 = int_to_ptr.vmem [resolvable:$true] %s70
      %76 = dma.hbm_to_vmem [thread:$0]  %s69, 256, %s71, [#allocation9], 128, 128, 8
    $region17: #{tpu_custom_call.1} parent=1 // pred_fallthru
      _
    // Predicated region
    $region18: #{tpu_custom_call.1} parent=1 // pred_check
      _
    $region19: #{tpu_custom_call.1} parent=1 // pred_check_branch
      %78 = sbr.rel (0) target = $region21
    $region20: #{tpu_custom_call.1} parent=1 // pred_region
      %79 = dma.done [#allocation3], 256
    $region21: #{tpu_custom_call.1} parent=1 // pred_fallthru
      _
    // Predicated region
    $region22: #{tpu_custom_call.1} parent=1 // pred_check
      _
    $region23: #{tpu_custom_call.1} parent=1 // pred_check_branch
      %81 = sbr.rel (0) target = $region25
    $region24: #{tpu_custom_call.1} parent=1 // pred_region
      %82 = dma.done [#allocation6], 256
    $region25: #{tpu_custom_call.1} parent=1 // pred_fallthru
      _
    // Predicated region
    $region26: #{tpu_custom_call.1} parent=1 // pred_check
      _
    $region27: #{tpu_custom_call.1} parent=1 // pred_check_branch
      %84 = sbr.rel (0) target = $region29
    $region28: #{tpu_custom_call.1} parent=1 // pred_region
      %85 = dma.done [#allocation6], 256
    $region29: #{tpu_custom_call.1} parent=1 // pred_fallthru
      _
    // Predicated region
    $region30: #{tpu_custom_call.1} parent=1 // pred_check
      _
    $region31: #{tpu_custom_call.1} parent=1 // pred_check_branch
      %87 = sbr.rel (0) target = $region33
    $region32: #{tpu_custom_call.1} parent=1 // pred_region
      %88 = dma.done [#allocation9], 256
    $region33: #{tpu_custom_call.1} parent=1 // pred_fallthru
      _
    %s89 = sadd.s32 0, 0
    %s90 = smul.u32 2, %s89
    %s91 = sadd.s32 0, 0
    %s92 = smul.u32 2, %s91
    %s93 = sadd.s32 0, 0
    %s94 = smul.u32 2, %s93
    %s95 = sadd.s32 0, 0
    %s96 = smul.u32 2, %s95
    %p97 = scmp.eq.s32.totalorder 0, 0
    // Predicated region
    $region34: #{tpu_custom_call.1} parent=1 // pred_check
      %p98 = pneg %p97
    $region35: #{tpu_custom_call.1} parent=1 // pred_check_branch
      %100 = sbr.rel (%p98) target = $region37
    $region36: #{tpu_custom_call.1} parent=1 // pred_region
      %101 = vst [vmem:[#allocation10] sm:$0xff] 0.0
      %102 = vst [vmem:[#allocation10 + $0x8] sm:$0xff] 0.0
    $region37: #{tpu_custom_call.1} parent=1 // pred_fallthru
      _
    %v103 = vld [vmem:[#allocation2] sm:$0xff]
    %v104 = vld [vmem:[#allocation2 + $0x8] sm:$0xff]
    %v105 = vld [vmem:[#allocation5] sm:$0xff]
    %v106 = vld [vmem:[#allocation5 + $0x8] sm:$0xff]
    %v107 = vsub.f32 %v103, %v105
    %v108 = vsub.f32 %v104, %v106
    %v109 = vld [vmem:[#allocation7] sm:$0xff]
    %v110 = vld [vmem:[#allocation7 + $0x8] sm:$0xff]
    %v111 = vld [vmem:[#allocation8] sm:$0xff]
    %v112 = vld [vmem:[#allocation8 + $0x8] sm:$0xff]
    %v113 = vsub.f32 %v109, %v111
    %v114 = vsub.f32 %v110, %v112
    %v115 = vld [vmem:[#allocation10] sm:$0xff]
    %v116 = vand.u32 2147483647, %v107
    %v117 = vand.u32 2147483647, %v108
    %v118 = vadd.f32 %v116, %v117
    %v119 = vadd.f32 %v115, %v118
    %120 = vst [vmem:[#allocation10] sm:$0xff] %v119
    %s121 = scalar_lea.vmem [#allocation10], 8
    %v122 = vld [vmem:[%s121] sm:$0xff]
    %v123 = vmul.f32 %v113, %v113
    %v124 = vmul.f32 %v114, %v114
    %v125 = vadd.f32 %v123, %v124
    %v126 = vadd.f32 %v122, %v125
    %127 = vst [vmem:[%s121] sm:$0xff] %v126
    // Predicated region
    $region38: #{tpu_custom_call.1} parent=1 // pred_check
      _
    $region39: #{tpu_custom_call.1} parent=1 // pred_check_branch
      %129 = sbr.rel (0) target = $region41
    $region40: #{tpu_custom_call.1} parent=1 // pred_region
      %s131 = ssub.s32 256, 256
      %132 = vsyncadd [#allocation4], %s131
      %s133 = sshll.u32 [#allocation10], 4
      %s134 = int_to_ptr.vmem [resolvable:$true] %s133
      %139 = dma.vmem_to_hbm [thread:$0]  %s134, 256, %s4, [#allocation4], 128, 128, 8
    $region41: #{tpu_custom_call.1} parent=1 // pred_fallthru
      _
    // Predicated region
    $region42: #{tpu_custom_call.1} parent=1 // pred_check
      _
    $region43: #{tpu_custom_call.1} parent=1 // pred_check_branch
      %141 = sbr.rel (0) target = $region45
    $region44: #{tpu_custom_call.1} parent=1 // pred_region
      %142 = dma.done [#allocation4], 256
    $region45: #{tpu_custom_call.1} parent=1 // pred_fallthru
      _
    %143 = vsyncpa [#allocation3], 1
    %144 = vsyncpa [#allocation6], 1
    %145 = vsyncpa [#allocation9], 1
    %146 = vsyncpa [#allocation4], 1

</llo_original>
